<compile_context>
chip_gen: v7x
topology: tpu7x:2x2x1
jax: 0.10.0
libtpu: 0.0.40
codegen_flags: <defaults>
</compile_context>

<pallas_src>
import functools
import numpy as np
import jax
import jax.numpy as jnp
from jax import lax
from jax.experimental import pallas as pl
from jax.experimental.pallas import tpu as pltpu


# --------------------- schedule setup (host-side glue, numpy) ---------------------

def clip_noise_schedule(alphas2: np.ndarray, clip_value: float = 0.001) -> np.ndarray:
    alphas2 = np.concatenate([np.ones(1), alphas2], axis=0)
    alphas_step = alphas2[1:] / alphas2[:-1]
    alphas_step = np.clip(alphas_step, a_min=clip_value, a_max=1.0)
    alphas2 = np.cumprod(alphas_step, axis=0)
    return alphas2


def polynomial_schedule(num_timesteps: int, s: float = 1e-4, power: float = 3.0) -> np.ndarray:
    steps = num_timesteps + 1
    x = np.linspace(0, steps, steps)
    alphas2 = (1 - np.power(x / steps, power)) ** 2
    alphas2 = clip_noise_schedule(alphas2, clip_value=0.001)
    precision = 1 - 2 * s
    alphas2 = precision * alphas2 + s
    return alphas2


def cosine_beta_schedule(num_timesteps: int, s: float = 0.008, raise_to_power: float = 1) -> np.ndarray:
    steps = num_timesteps + 2
    x = np.linspace(0, steps, steps)
    alphas_cumprod = np.cos((x / steps + s) / (1 + s) * np.pi * 0.5) ** 2
    alphas_cumprod = alphas_cumprod / alphas_cumprod[0]
    betas = 1 - alphas_cumprod[1:] / alphas_cumprod[:-1]
    betas = np.clip(betas, a_min=0, a_max=0.999)
    alphas = 1.0 - betas
    alphas_cumprod = np.cumprod(alphas, axis=0)
    if raise_to_power != 1:
        alphas_cumprod = np.power(alphas_cumprod, raise_to_power)
    return alphas_cumprod


def build_gamma_table(noise_schedule: str, num_timesteps: int, noise_precision: float) -> np.ndarray:
    if noise_schedule == "cosine":
        alphas2 = cosine_beta_schedule(num_timesteps)
    elif "polynomial" in noise_schedule:
        splits = noise_schedule.split("_")
        assert len(splits) == 2
        power = float(splits[1])
        alphas2 = polynomial_schedule(num_timesteps, s=noise_precision, power=power)
    else:
        raise ValueError(noise_schedule)
    sigmas2 = 1 - alphas2
    log_alphas2 = np.log(alphas2)
    log_sigmas2 = np.log(sigmas2)
    log_alphas2_to_sigmas2 = log_alphas2 - log_sigmas2
    gamma = (-log_alphas2_to_sigmas2).astype(np.float32)   # matches .float() in PyTorch
    return gamma                                            # shape (num_timesteps + 1,)


# ----------------------------- Pallas kernel (hot path) -----------------------------

def _gamma_lookup_kernel(t_ref, gamma_ref, o_ref, *,
                         timesteps: int, table_len: int, table_pad: int, nchain: int):
    # t_ref:     (block_rows, 128) f32 VMEM  -- lane-dense batch tile of normalized times
    # gamma_ref: (table_pad,)      f32 SMEM  -- gamma table, padded to a multiple of nchain
    # o_ref:     (block_rows, 128) f32 VMEM  -- gamma[round(t * timesteps)]
    block_rows = t_ref.shape[0]
    nchunks = block_rows // 8          # number of (8,128) vreg-sized chunks in this block
    steps = table_pad // nchain        # table entries handled per chain

    def gather_chunk(t):
        # t: (8,128) f32 -- exactly one f32 vreg; everything below stays register resident.
        t_int = jnp.round(t * jnp.float32(timesteps)).astype(jnp.int32)
        t_int = jnp.clip(t_int, 0, table_len - 1)      # OOB t / batch padding -> valid entry
        zero = jnp.zeros_like(t)

        def entry(k, acc):
            # 1 compare + 1 select on the VPU; gamma_ref[k] is an SMEM scalar load that
            # co-issues on the (otherwise idle) scalar slots.
            return jnp.where(t_int == k, gamma_ref[k], acc)

        if steps <= 128:
            # Fully unrolled straight-line code: nchain independent select chains give the
            # VLIW scheduler ILP (a single carried accumulator serializes on select latency).
            accs = [zero] * nchain
            for i in range(steps):
                for c in range(nchain):
                    accs[c] = entry(i * nchain + c, accs[c])
        else:
            # Large tables (e.g. T=1000): bounded code size, still nchain-way ILP per step.
            def body(i, a):
                return tuple(entry(i * nchain + c, a[c]) for c in range(nchain))
            accs = list(lax.fori_loop(0, steps, body, (zero,) * nchain, unroll=8))

        # Exactly one table entry matches (t_int is clamped into range), every other chain
        # still holds 0.0, so a tree-sum recombines the chains exactly.
        while len(accs) > 1:
            nxt = [accs[i] + accs[i + 1] for i in range(0, len(accs) - 1, 2)]
            if len(accs) % 2:
                nxt.append(accs[-1])
            accs = nxt
        return accs[0]

    def chunk_body(r, carry):
        row0 = pl.multiple_of(r * 8, 8)
        o_ref[pl.ds(row0, 8), :] = gather_chunk(t_ref[pl.ds(row0, 8), :])
        return carry

    lax.fori_loop(0, nchunks, chunk_body, 0)


def _cdiv(a: int, b: int) -> int:
    return (a + b - 1) // b


def predefined_noise_schedule_forward(t: jax.Array, gamma_table: jax.Array, timesteps: int,
                                       *, max_block_rows: int = 512, nchain: int = 8) -> jax.Array:
    """t: any shape, float; gamma_table: (timesteps+1,) f32. Returns gamma[round(t*T)], same shape as t."""
    orig_shape = t.shape
    t_flat = jnp.ravel(t).astype(jnp.float32)
    B = int(t_flat.shape[0])
    table_len = int(gamma_table.shape[0])
    table_pad = _cdiv(table_len, nchain) * nchain

    LANES = 128
    rows = max(1, _cdiv(B, LANES))

    # Block sizing:
    #   - big blocks amortize the ~0.35 us/step pipeline overhead,
    #   - when there are >= 16 rows, force >= 2 grid steps so the "parallel" axis can
    #     shard across both TensorCores on v7x (harmless on single-core v5e/v6e).
    target_rows = _cdiv(rows, 2) if rows >= 16 else rows
    block_rows = min(max_block_rows, _cdiv(target_rows, 8) * 8)
    block_rows = max(block_rows, 8)
    rows_pad = _cdiv(rows, block_rows) * block_rows
    n_pad = rows_pad * LANES

    # TODO(synk): the pad+reshape is an extra HBM copy of t; at small B the whole op is
    # launch-bound anyway and a fused jnp.take in the surrounding graph is cheaper.
    t_2d = jnp.pad(t_flat, (0, n_pad - B)).reshape(rows_pad, LANES)
    gamma_pad = jnp.pad(gamma_table.astype(jnp.float32), (0, table_pad - table_len))

    kernel = functools.partial(_gamma_lookup_kernel, timesteps=timesteps,
                               table_len=table_len, table_pad=table_pad, nchain=nchain)

    n_elems = rows_pad * LANES
    cost = pl.CostEstimate(flops=int(n_elems * (2 * table_pad + 5)),
                           transcendentals=0,
                           bytes_accessed=int(8 * n_elems + 4 * table_pad))

    out_2d = pl.pallas_call(
        kernel,
        out_shape=jax.ShapeDtypeStruct((rows_pad, LANES), jnp.float32),
        grid=(rows_pad // block_rows,),
        in_specs=[
            pl.BlockSpec((block_rows, LANES), lambda i: (i, 0)),          # lane-dense batch tile
            pl.BlockSpec(memory_space=pltpu.MemorySpace.SMEM),            # whole gamma table in SMEM
        ],
        out_specs=pl.BlockSpec((block_rows, LANES), lambda i: (i, 0)),    # lane-dense, unmasked stores
        compiler_params=pltpu.CompilerParams(dimension_semantics=("parallel",)),
        cost_estimate=cost,
    )(t_2d, gamma_pad)

    return out_2d.reshape(-1)[:B].reshape(orig_shape)


# ----------------------------- demo / check -----------------------------

if __name__ == "__main__":
    num_timesteps = 100
    noise_schedule = "polynomial_2"
    noise_precision = 1e-5

    gamma_np = build_gamma_table(noise_schedule, num_timesteps, noise_precision)  # (101,)
    gamma_table = jnp.asarray(gamma_np)

    key = jax.random.PRNGKey(0)
    k1, k2 = jax.random.split(key)

    # (batch, 1) normalized times in [0, 1], as used by the diffusion model
    t_small = jax.random.uniform(k1, (8, 1), dtype=jnp.float32)
    out_small = jax.block_until_ready(
        predefined_noise_schedule_forward(t_small, gamma_table, num_timesteps))
    ref_small = gamma_table[jnp.round(t_small * num_timesteps).astype(jnp.int32)]
    np.testing.assert_allclose(np.asarray(out_small), np.asarray(ref_small), rtol=0, atol=0)

    # Larger batch: exercises padding, the in-kernel chunk loop and the multi-step grid
    # (>= 2 steps -> both TensorCores on v7x).
    t_big = jax.random.uniform(k2, (512, 8), dtype=jnp.float32)
    out_big = jax.block_until_ready(
        predefined_noise_schedule_forward(t_big, gamma_table, num_timesteps))
    ref_big = gamma_table[jnp.round(t_big * num_timesteps).astype(jnp.int32)]
    np.testing.assert_allclose(np.asarray(out_big), np.asarray(ref_big), rtol=0, atol=0)

    print("KERNEL_OK")
</pallas_src>

<mosaic_0001>
module attributes {stable_mosaic.version = 11 : i64} {
  func.func @_gamma_lookup_kernel(%arg0: i32, %arg1: memref<8x128xf32, #tpu.memory_space<vmem>>, %arg2: memref<104xf32, #tpu.memory_space<smem>>, %arg3: memref<8x128xf32, #tpu.memory_space<vmem>>) attributes {dimension_semantics = [#tpu.dimension_semantics<parallel>], iteration_bounds = array<i64: 1>, scalar_prefetch = 0 : i64, scratch_operands = 0 : i64, tpu.core_type = #tpu.core_type<tc>, window_params = [{transform_indices = @transform_0, window_bounds = array<i64: 8, 128>}, {transform_indices = @transform_1, window_bounds = array<i64: 104>}, {transform_indices = @transform_2, window_bounds = array<i64: 8, 128>}]} {
    %c0_i32 = arith.constant 0 : i32
    %c8_i32 = arith.constant 8 : i32
    %0 = arith.muli %c0_i32, %c8_i32 : i32
    %1 = tpu.assume_multiple %0, 8 : i32
    %2 = arith.index_cast %1 : i32 to index
    %c0 = arith.constant 0 : index
    %3 = vector.load %arg1[%2, %c0] : memref<8x128xf32, #tpu.memory_space<vmem>>, vector<8x128xf32>
    %cst = arith.constant 1.000000e+02 : f32
    %4 = vector.broadcast %cst : f32 to vector<8x128xf32>
    %5 = arith.mulf %3, %4 : vector<8x128xf32>
    %6 = math.roundeven %5 : vector<8x128xf32>
    %7 = arith.fptosi %6 : vector<8x128xf32> to vector<8x128xi32>
    %c0_i32_0 = arith.constant 0 : i32
    %c100_i32 = arith.constant 100 : i32
    %8 = vector.broadcast %c0_i32_0 : i32 to vector<8x128xi32>
    %9 = arith.maxsi %8, %7 : vector<8x128xi32>
    %10 = vector.broadcast %c100_i32 : i32 to vector<8x128xi32>
    %11 = arith.minsi %10, %9 : vector<8x128xi32>
    %cst_1 = arith.constant 0.000000e+00 : f32
    %12 = vector.broadcast %cst_1 : f32 to vector<8x128xf32>
    %c0_i32_2 = arith.constant 0 : i32
    %13 = vector.broadcast %c0_i32_2 : i32 to vector<8x128xi32>
    %14 = arith.cmpi eq, %11, %13 : vector<8x128xi32>
    %c0_3 = arith.constant 0 : index
    %15 = memref.load %arg2[%c0_3] : memref<104xf32, #tpu.memory_space<smem>>
    %16 = vector.broadcast %15 : f32 to vector<8x128xf32>
    %17 = arith.select %14, %16, %12 : vector<8x128xi1>, vector<8x128xf32>
    %c1_i32 = arith.constant 1 : i32
    %18 = vector.broadcast %c1_i32 : i32 to vector<8x128xi32>
    %19 = arith.cmpi eq, %11, %18 : vector<8x128xi32>
    %c1 = arith.constant 1 : index
    %20 = memref.load %arg2[%c1] : memref<104xf32, #tpu.memory_space<smem>>
    %21 = vector.broadcast %20 : f32 to vector<8x128xf32>
    %22 = arith.select %19, %21, %12 : vector<8x128xi1>, vector<8x128xf32>
    %c2_i32 = arith.constant 2 : i32
    %23 = vector.broadcast %c2_i32 : i32 to vector<8x128xi32>
    %24 = arith.cmpi eq, %11, %23 : vector<8x128xi32>
    %c2 = arith.constant 2 : index
    %25 = memref.load %arg2[%c2] : memref<104xf32, #tpu.memory_space<smem>>
    %26 = vector.broadcast %25 : f32 to vector<8x128xf32>
    %27 = arith.select %24, %26, %12 : vector<8x128xi1>, vector<8x128xf32>
    %c3_i32 = arith.constant 3 : i32
    %28 = vector.broadcast %c3_i32 : i32 to vector<8x128xi32>
    %29 = arith.cmpi eq, %11, %28 : vector<8x128xi32>
    %c3 = arith.constant 3 : index
    %30 = memref.load %arg2[%c3] : memref<104xf32, #tpu.memory_space<smem>>
    %31 = vector.broadcast %30 : f32 to vector<8x128xf32>
    %32 = arith.select %29, %31, %12 : vector<8x128xi1>, vector<8x128xf32>
    %c4_i32 = arith.constant 4 : i32
    %33 = vector.broadcast %c4_i32 : i32 to vector<8x128xi32>
    %34 = arith.cmpi eq, %11, %33 : vector<8x128xi32>
    %c4 = arith.constant 4 : index
    %35 = memref.load %arg2[%c4] : memref<104xf32, #tpu.memory_space<smem>>
    %36 = vector.broadcast %35 : f32 to vector<8x128xf32>
    %37 = arith.select %34, %36, %12 : vector<8x128xi1>, vector<8x128xf32>
    %c5_i32 = arith.constant 5 : i32
    %38 = vector.broadcast %c5_i32 : i32 to vector<8x128xi32>
    %39 = arith.cmpi eq, %11, %38 : vector<8x128xi32>
    %c5 = arith.constant 5 : index
    %40 = memref.load %arg2[%c5] : memref<104xf32, #tpu.memory_space<smem>>
    %41 = vector.broadcast %40 : f32 to vector<8x128xf32>
    %42 = arith.select %39, %41, %12 : vector<8x128xi1>, vector<8x128xf32>
    %c6_i32 = arith.constant 6 : i32
    %43 = vector.broadcast %c6_i32 : i32 to vector<8x128xi32>
    %44 = arith.cmpi eq, %11, %43 : vector<8x128xi32>
    %c6 = arith.constant 6 : index
    %45 = memref.load %arg2[%c6] : memref<104xf32, #tpu.memory_space<smem>>
    %46 = vector.broadcast %45 : f32 to vector<8x128xf32>
    %47 = arith.select %44, %46, %12 : vector<8x128xi1>, vector<8x128xf32>
    %c7_i32 = arith.constant 7 : i32
    %48 = vector.broadcast %c7_i32 : i32 to vector<8x128xi32>
    %49 = arith.cmpi eq, %11, %48 : vector<8x128xi32>
    %c7 = arith.constant 7 : index
    %50 = memref.load %arg2[%c7] : memref<104xf32, #tpu.memory_space<smem>>
    %51 = vector.broadcast %50 : f32 to vector<8x128xf32>
    %52 = arith.select %49, %51, %12 : vector<8x128xi1>, vector<8x128xf32>
    %c8_i32_4 = arith.constant 8 : i32
    %53 = vector.broadcast %c8_i32_4 : i32 to vector<8x128xi32>
    %54 = arith.cmpi eq, %11, %53 : vector<8x128xi32>
    %c8 = arith.constant 8 : index
    %55 = memref.load %arg2[%c8] : memref<104xf32, #tpu.memory_space<smem>>
    %56 = vector.broadcast %55 : f32 to vector<8x128xf32>
    %57 = arith.select %54, %56, %17 : vector<8x128xi1>, vector<8x128xf32>
    %c9_i32 = arith.constant 9 : i32
    %58 = vector.broadcast %c9_i32 : i32 to vector<8x128xi32>
    %59 = arith.cmpi eq, %11, %58 : vector<8x128xi32>
    %c9 = arith.constant 9 : index
    %60 = memref.load %arg2[%c9] : memref<104xf32, #tpu.memory_space<smem>>
    %61 = vector.broadcast %60 : f32 to vector<8x128xf32>
    %62 = arith.select %59, %61, %22 : vector<8x128xi1>, vector<8x128xf32>
    %c10_i32 = arith.constant 10 : i32
    %63 = vector.broadcast %c10_i32 : i32 to vector<8x128xi32>
    %64 = arith.cmpi eq, %11, %63 : vector<8x128xi32>
    %c10 = arith.constant 10 : index
    %65 = memref.load %arg2[%c10] : memref<104xf32, #tpu.memory_space<smem>>
    %66 = vector.broadcast %65 : f32 to vector<8x128xf32>
    %67 = arith.select %64, %66, %27 : vector<8x128xi1>, vector<8x128xf32>
    %c11_i32 = arith.constant 11 : i32
    %68 = vector.broadcast %c11_i32 : i32 to vector<8x128xi32>
    %69 = arith.cmpi eq, %11, %68 : vector<8x128xi32>
    %c11 = arith.constant 11 : index
    %70 = memref.load %arg2[%c11] : memref<104xf32, #tpu.memory_space<smem>>
    %71 = vector.broadcast %70 : f32 to vector<8x128xf32>
    %72 = arith.select %69, %71, %32 : vector<8x128xi1>, vector<8x128xf32>
    %c12_i32 = arith.constant 12 : i32
    %73 = vector.broadcast %c12_i32 : i32 to vector<8x128xi32>
    %74 = arith.cmpi eq, %11, %73 : vector<8x128xi32>
    %c12 = arith.constant 12 : index
    %75 = memref.load %arg2[%c12] : memref<104xf32, #tpu.memory_space<smem>>
    %76 = vector.broadcast %75 : f32 to vector<8x128xf32>
    %77 = arith.select %74, %76, %37 : vector<8x128xi1>, vector<8x128xf32>
    %c13_i32 = arith.constant 13 : i32
    %78 = vector.broadcast %c13_i32 : i32 to vector<8x128xi32>
    %79 = arith.cmpi eq, %11, %78 : vector<8x128xi32>
    %c13 = arith.constant 13 : index
    %80 = memref.load %arg2[%c13] : memref<104xf32, #tpu.memory_space<smem>>
    %81 = vector.broadcast %80 : f32 to vector<8x128xf32>
    %82 = arith.select %79, %81, %42 : vector<8x128xi1>, vector<8x128xf32>
    %c14_i32 = arith.constant 14 : i32
    %83 = vector.broadcast %c14_i32 : i32 to vector<8x128xi32>
    %84 = arith.cmpi eq, %11, %83 : vector<8x128xi32>
    %c14 = arith.constant 14 : index
    %85 = memref.load %arg2[%c14] : memref<104xf32, #tpu.memory_space<smem>>
    %86 = vector.broadcast %85 : f32 to vector<8x128xf32>
    %87 = arith.select %84, %86, %47 : vector<8x128xi1>, vector<8x128xf32>
    %c15_i32 = arith.constant 15 : i32
    %88 = vector.broadcast %c15_i32 : i32 to vector<8x128xi32>
    %89 = arith.cmpi eq, %11, %88 : vector<8x128xi32>
    %c15 = arith.constant 15 : index
    %90 = memref.load %arg2[%c15] : memref<104xf32, #tpu.memory_space<smem>>
    %91 = vector.broadcast %90 : f32 to vector<8x128xf32>
    %92 = arith.select %89, %91, %52 : vector<8x128xi1>, vector<8x128xf32>
    %c16_i32 = arith.constant 16 : i32
    %93 = vector.broadcast %c16_i32 : i32 to vector<8x128xi32>
    %94 = arith.cmpi eq, %11, %93 : vector<8x128xi32>
    %c16 = arith.constant 16 : index
    %95 = memref.load %arg2[%c16] : memref<104xf32, #tpu.memory_space<smem>>
    %96 = vector.broadcast %95 : f32 to vector<8x128xf32>
    %97 = arith.select %94, %96, %57 : vector<8x128xi1>, vector<8x128xf32>
    %c17_i32 = arith.constant 17 : i32
    %98 = vector.broadcast %c17_i32 : i32 to vector<8x128xi32>
    %99 = arith.cmpi eq, %11, %98 : vector<8x128xi32>
    %c17 = arith.constant 17 : index
    %100 = memref.load %arg2[%c17] : memref<104xf32, #tpu.memory_space<smem>>
    %101 = vector.broadcast %100 : f32 to vector<8x128xf32>
    %102 = arith.select %99, %101, %62 : vector<8x128xi1>, vector<8x128xf32>
    %c18_i32 = arith.constant 18 : i32
    %103 = vector.broadcast %c18_i32 : i32 to vector<8x128xi32>
    %104 = arith.cmpi eq, %11, %103 : vector<8x128xi32>
    %c18 = arith.constant 18 : index
    %105 = memref.load %arg2[%c18] : memref<104xf32, #tpu.memory_space<smem>>
    %106 = vector.broadcast %105 : f32 to vector<8x128xf32>
    %107 = arith.select %104, %106, %67 : vector<8x128xi1>, vector<8x128xf32>
    %c19_i32 = arith.constant 19 : i32
    %108 = vector.broadcast %c19_i32 : i32 to vector<8x128xi32>
    %109 = arith.cmpi eq, %11, %108 : vector<8x128xi32>
    %c19 = arith.constant 19 : index
    %110 = memref.load %arg2[%c19] : memref<104xf32, #tpu.memory_space<smem>>
    %111 = vector.broadcast %110 : f32 to vector<8x128xf32>
    %112 = arith.select %109, %111, %72 : vector<8x128xi1>, vector<8x128xf32>
    %c20_i32 = arith.constant 20 : i32
    %113 = vector.broadcast %c20_i32 : i32 to vector<8x128xi32>
    %114 = arith.cmpi eq, %11, %113 : vector<8x128xi32>
    %c20 = arith.constant 20 : index
    %115 = memref.load %arg2[%c20] : memref<104xf32, #tpu.memory_space<smem>>
    %116 = vector.broadcast %115 : f32 to vector<8x128xf32>
    %117 = arith.select %114, %116, %77 : vector<8x128xi1>, vector<8x128xf32>
    %c21_i32 = arith.constant 21 : i32
    %118 = vector.broadcast %c21_i32 : i32 to vector<8x128xi32>
    %119 = arith.cmpi eq, %11, %118 : vector<8x128xi32>
    %c21 = arith.constant 21 : index
    %120 = memref.load %arg2[%c21] : memref<104xf32, #tpu.memory_space<smem>>
    %121 = vector.broadcast %120 : f32 to vector<8x128xf32>
    %122 = arith.select %119, %121, %82 : vector<8x128xi1>, vector<8x128xf32>
    %c22_i32 = arith.constant 22 : i32
    %123 = vector.broadcast %c22_i32 : i32 to vector<8x128xi32>
    %124 = arith.cmpi eq, %11, %123 : vector<8x128xi32>
    %c22 = arith.constant 22 : index
    %125 = memref.load %arg2[%c22] : memref<104xf32, #tpu.memory_space<smem>>
    %126 = vector.broadcast %125 : f32 to vector<8x128xf32>
    %127 = arith.select %124, %126, %87 : vector<8x128xi1>, vector<8x128xf32>
    %c23_i32 = arith.constant 23 : i32
    %128 = vector.broadcast %c23_i32 : i32 to vector<8x128xi32>
    %129 = arith.cmpi eq, %11, %128 : vector<8x128xi32>
    %c23 = arith.constant 23 : index
    %130 = memref.load %arg2[%c23] : memref<104xf32, #tpu.memory_space<smem>>
    %131 = vector.broadcast %130 : f32 to vector<8x128xf32>
    %132 = arith.select %129, %131, %92 : vector<8x128xi1>, vector<8x128xf32>
    %c24_i32 = arith.constant 24 : i32
    %133 = vector.broadcast %c24_i32 : i32 to vector<8x128xi32>
    %134 = arith.cmpi eq, %11, %133 : vector<8x128xi32>
    %c24 = arith.constant 24 : index
    %135 = memref.load %arg2[%c24] : memref<104xf32, #tpu.memory_space<smem>>
    %136 = vector.broadcast %135 : f32 to vector<8x128xf32>
    %137 = arith.select %134, %136, %97 : vector<8x128xi1>, vector<8x128xf32>
    %c25_i32 = arith.constant 25 : i32
    %138 = vector.broadcast %c25_i32 : i32 to vector<8x128xi32>
    %139 = arith.cmpi eq, %11, %138 : vector<8x128xi32>
    %c25 = arith.constant 25 : index
    %140 = memref.load %arg2[%c25] : memref<104xf32, #tpu.memory_space<smem>>
    %141 = vector.broadcast %140 : f32 to vector<8x128xf32>
    %142 = arith.select %139, %141, %102 : vector<8x128xi1>, vector<8x128xf32>
    %c26_i32 = arith.constant 26 : i32
    %143 = vector.broadcast %c26_i32 : i32 to vector<8x128xi32>
    %144 = arith.cmpi eq, %11, %143 : vector<8x128xi32>
    %c26 = arith.constant 26 : index
    %145 = memref.load %arg2[%c26] : memref<104xf32, #tpu.memory_space<smem>>
    %146 = vector.broadcast %145 : f32 to vector<8x128xf32>
    %147 = arith.select %144, %146, %107 : vector<8x128xi1>, vector<8x128xf32>
    %c27_i32 = arith.constant 27 : i32
    %148 = vector.broadcast %c27_i32 : i32 to vector<8x128xi32>
    %149 = arith.cmpi eq, %11, %148 : vector<8x128xi32>
    %c27 = arith.constant 27 : index
    %150 = memref.load %arg2[%c27] : memref<104xf32, #tpu.memory_space<smem>>
    %151 = vector.broadcast %150 : f32 to vector<8x128xf32>
    %152 = arith.select %149, %151, %112 : vector<8x128xi1>, vector<8x128xf32>
    %c28_i32 = arith.constant 28 : i32
    %153 = vector.broadcast %c28_i32 : i32 to vector<8x128xi32>
    %154 = arith.cmpi eq, %11, %153 : vector<8x128xi32>
    %c28 = arith.constant 28 : index
    %155 = memref.load %arg2[%c28] : memref<104xf32, #tpu.memory_space<smem>>
    %156 = vector.broadcast %155 : f32 to vector<8x128xf32>
    %157 = arith.select %154, %156, %117 : vector<8x128xi1>, vector<8x128xf32>
    %c29_i32 = arith.constant 29 : i32
    %158 = vector.broadcast %c29_i32 : i32 to vector<8x128xi32>
    %159 = arith.cmpi eq, %11, %158 : vector<8x128xi32>
    %c29 = arith.constant 29 : index
    %160 = memref.load %arg2[%c29] : memref<104xf32, #tpu.memory_space<smem>>
    %161 = vector.broadcast %160 : f32 to vector<8x128xf32>
    %162 = arith.select %159, %161, %122 : vector<8x128xi1>, vector<8x128xf32>
    %c30_i32 = arith.constant 30 : i32
    %163 = vector.broadcast %c30_i32 : i32 to vector<8x128xi32>
    %164 = arith.cmpi eq, %11, %163 : vector<8x128xi32>
    %c30 = arith.constant 30 : index
    %165 = memref.load %arg2[%c30] : memref<104xf32, #tpu.memory_space<smem>>
    %166 = vector.broadcast %165 : f32 to vector<8x128xf32>
    %167 = arith.select %164, %166, %127 : vector<8x128xi1>, vector<8x128xf32>
    %c31_i32 = arith.constant 31 : i32
    %168 = vector.broadcast %c31_i32 : i32 to vector<8x128xi32>
    %169 = arith.cmpi eq, %11, %168 : vector<8x128xi32>
    %c31 = arith.constant 31 : index
    %170 = memref.load %arg2[%c31] : memref<104xf32, #tpu.memory_space<smem>>
    %171 = vector.broadcast %170 : f32 to vector<8x128xf32>
    %172 = arith.select %169, %171, %132 : vector<8x128xi1>, vector<8x128xf32>
    %c32_i32 = arith.constant 32 : i32
    %173 = vector.broadcast %c32_i32 : i32 to vector<8x128xi32>
    %174 = arith.cmpi eq, %11, %173 : vector<8x128xi32>
    %c32 = arith.constant 32 : index
    %175 = memref.load %arg2[%c32] : memref<104xf32, #tpu.memory_space<smem>>
    %176 = vector.broadcast %175 : f32 to vector<8x128xf32>
    %177 = arith.select %174, %176, %137 : vector<8x128xi1>, vector<8x128xf32>
    %c33_i32 = arith.constant 33 : i32
    %178 = vector.broadcast %c33_i32 : i32 to vector<8x128xi32>
    %179 = arith.cmpi eq, %11, %178 : vector<8x128xi32>
    %c33 = arith.constant 33 : index
    %180 = memref.load %arg2[%c33] : memref<104xf32, #tpu.memory_space<smem>>
    %181 = vector.broadcast %180 : f32 to vector<8x128xf32>
    %182 = arith.select %179, %181, %142 : vector<8x128xi1>, vector<8x128xf32>
    %c34_i32 = arith.constant 34 : i32
    %183 = vector.broadcast %c34_i32 : i32 to vector<8x128xi32>
    %184 = arith.cmpi eq, %11, %183 : vector<8x128xi32>
    %c34 = arith.constant 34 : index
    %185 = memref.load %arg2[%c34] : memref<104xf32, #tpu.memory_space<smem>>
    %186 = vector.broadcast %185 : f32 to vector<8x128xf32>
    %187 = arith.select %184, %186, %147 : vector<8x128xi1>, vector<8x128xf32>
    %c35_i32 = arith.constant 35 : i32
    %188 = vector.broadcast %c35_i32 : i32 to vector<8x128xi32>
    %189 = arith.cmpi eq, %11, %188 : vector<8x128xi32>
    %c35 = arith.constant 35 : index
    %190 = memref.load %arg2[%c35] : memref<104xf32, #tpu.memory_space<smem>>
    %191 = vector.broadcast %190 : f32 to vector<8x128xf32>
    %192 = arith.select %189, %191, %152 : vector<8x128xi1>, vector<8x128xf32>
    %c36_i32 = arith.constant 36 : i32
    %193 = vector.broadcast %c36_i32 : i32 to vector<8x128xi32>
    %194 = arith.cmpi eq, %11, %193 : vector<8x128xi32>
    %c36 = arith.constant 36 : index
    %195 = memref.load %arg2[%c36] : memref<104xf32, #tpu.memory_space<smem>>
    %196 = vector.broadcast %195 : f32 to vector<8x128xf32>
    %197 = arith.select %194, %196, %157 : vector<8x128xi1>, vector<8x128xf32>
    %c37_i32 = arith.constant 37 : i32
    %198 = vector.broadcast %c37_i32 : i32 to vector<8x128xi32>
    %199 = arith.cmpi eq, %11, %198 : vector<8x128xi32>
    %c37 = arith.constant 37 : index
    %200 = memref.load %arg2[%c37] : memref<104xf32, #tpu.memory_space<smem>>
    %201 = vector.broadcast %200 : f32 to vector<8x128xf32>
    %202 = arith.select %199, %201, %162 : vector<8x128xi1>, vector<8x128xf32>
    %c38_i32 = arith.constant 38 : i32
    %203 = vector.broadcast %c38_i32 : i32 to vector<8x128xi32>
    %204 = arith.cmpi eq, %11, %203 : vector<8x128xi32>
    %c38 = arith.constant 38 : index
    %205 = memref.load %arg2[%c38] : memref<104xf32, #tpu.memory_space<smem>>
    %206 = vector.broadcast %205 : f32 to vector<8x128xf32>
    %207 = arith.select %204, %206, %167 : vector<8x128xi1>, vector<8x128xf32>
    %c39_i32 = arith.constant 39 : i32
    %208 = vector.broadcast %c39_i32 : i32 to vector<8x128xi32>
    %209 = arith.cmpi eq, %11, %208 : vector<8x128xi32>
    %c39 = arith.constant 39 : index
    %210 = memref.load %arg2[%c39] : memref<104xf32, #tpu.memory_space<smem>>
    %211 = vector.broadcast %210 : f32 to vector<8x128xf32>
    %212 = arith.select %209, %211, %172 : vector<8x128xi1>, vector<8x128xf32>
    %c40_i32 = arith.constant 40 : i32
    %213 = vector.broadcast %c40_i32 : i32 to vector<8x128xi32>
    %214 = arith.cmpi eq, %11, %213 : vector<8x128xi32>
    %c40 = arith.constant 40 : index
    %215 = memref.load %arg2[%c40] : memref<104xf32, #tpu.memory_space<smem>>
    %216 = vector.broadcast %215 : f32 to vector<8x128xf32>
    %217 = arith.select %214, %216, %177 : vector<8x128xi1>, vector<8x128xf32>
    %c41_i32 = arith.constant 41 : i32
    %218 = vector.broadcast %c41_i32 : i32 to vector<8x128xi32>
    %219 = arith.cmpi eq, %11, %218 : vector<8x128xi32>
    %c41 = arith.constant 41 : index
    %220 = memref.load %arg2[%c41] : memref<104xf32, #tpu.memory_space<smem>>
    %221 = vector.broadcast %220 : f32 to vector<8x128xf32>
    %222 = arith.select %219, %221, %182 : vector<8x128xi1>, vector<8x128xf32>
    %c42_i32 = arith.constant 42 : i32
    %223 = vector.broadcast %c42_i32 : i32 to vector<8x128xi32>
    %224 = arith.cmpi eq, %11, %223 : vector<8x128xi32>
    %c42 = arith.constant 42 : index
    %225 = memref.load %arg2[%c42] : memref<104xf32, #tpu.memory_space<smem>>
    %226 = vector.broadcast %225 : f32 to vector<8x128xf32>
    %227 = arith.select %224, %226, %187 : vector<8x128xi1>, vector<8x128xf32>
    %c43_i32 = arith.constant 43 : i32
    %228 = vector.broadcast %c43_i32 : i32 to vector<8x128xi32>
    %229 = arith.cmpi eq, %11, %228 : vector<8x128xi32>
    %c43 = arith.constant 43 : index
    %230 = memref.load %arg2[%c43] : memref<104xf32, #tpu.memory_space<smem>>
    %231 = vector.broadcast %230 : f32 to vector<8x128xf32>
    %232 = arith.select %229, %231, %192 : vector<8x128xi1>, vector<8x128xf32>
    %c44_i32 = arith.constant 44 : i32
    %233 = vector.broadcast %c44_i32 : i32 to vector<8x128xi32>
    %234 = arith.cmpi eq, %11, %233 : vector<8x128xi32>
    %c44 = arith.constant 44 : index
    %235 = memref.load %arg2[%c44] : memref<104xf32, #tpu.memory_space<smem>>
    %236 = vector.broadcast %235 : f32 to vector<8x128xf32>
    %237 = arith.select %234, %236, %197 : vector<8x128xi1>, vector<8x128xf32>
    %c45_i32 = arith.constant 45 : i32
    %238 = vector.broadcast %c45_i32 : i32 to vector<8x128xi32>
    %239 = arith.cmpi eq, %11, %238 : vector<8x128xi32>
    %c45 = arith.constant 45 : index
    %240 = memref.load %arg2[%c45] : memref<104xf32, #tpu.memory_space<smem>>
    %241 = vector.broadcast %240 : f32 to vector<8x128xf32>
    %242 = arith.select %239, %241, %202 : vector<8x128xi1>, vector<8x128xf32>
    %c46_i32 = arith.constant 46 : i32
    %243 = vector.broadcast %c46_i32 : i32 to vector<8x128xi32>
    %244 = arith.cmpi eq, %11, %243 : vector<8x128xi32>
    %c46 = arith.constant 46 : index
    %245 = memref.load %arg2[%c46] : memref<104xf32, #tpu.memory_space<smem>>
    %246 = vector.broadcast %245 : f32 to vector<8x128xf32>
    %247 = arith.select %244, %246, %207 : vector<8x128xi1>, vector<8x128xf32>
    %c47_i32 = arith.constant 47 : i32
    %248 = vector.broadcast %c47_i32 : i32 to vector<8x128xi32>
    %249 = arith.cmpi eq, %11, %248 : vector<8x128xi32>
    %c47 = arith.constant 47 : index
    %250 = memref.load %arg2[%c47] : memref<104xf32, #tpu.memory_space<smem>>
    %251 = vector.broadcast %250 : f32 to vector<8x128xf32>
    %252 = arith.select %249, %251, %212 : vector<8x128xi1>, vector<8x128xf32>
    %c48_i32 = arith.constant 48 : i32
    %253 = vector.broadcast %c48_i32 : i32 to vector<8x128xi32>
    %254 = arith.cmpi eq, %11, %253 : vector<8x128xi32>
    %c48 = arith.constant 48 : index
    %255 = memref.load %arg2[%c48] : memref<104xf32, #tpu.memory_space<smem>>
    %256 = vector.broadcast %255 : f32 to vector<8x128xf32>
    %257 = arith.select %254, %256, %217 : vector<8x128xi1>, vector<8x128xf32>
    %c49_i32 = arith.constant 49 : i32
    %258 = vector.broadcast %c49_i32 : i32 to vector<8x128xi32>
    %259 = arith.cmpi eq, %11, %258 : vector<8x128xi32>
    %c49 = arith.constant 49 : index
    %260 = memref.load %arg2[%c49] : memref<104xf32, #tpu.memory_space<smem>>
    %261 = vector.broadcast %260 : f32 to vector<8x128xf32>
    %262 = arith.select %259, %261, %222 : vector<8x128xi1>, vector<8x128xf32>
    %c50_i32 = arith.constant 50 : i32
    %263 = vector.broadcast %c50_i32 : i32 to vector<8x128xi32>
    %264 = arith.cmpi eq, %11, %263 : vector<8x128xi32>
    %c50 = arith.constant 50 : index
    %265 = memref.load %arg2[%c50] : memref<104xf32, #tpu.memory_space<smem>>
    %266 = vector.broadcast %265 : f32 to vector<8x128xf32>
    %267 = arith.select %264, %266, %227 : vector<8x128xi1>, vector<8x128xf32>
    %c51_i32 = arith.constant 51 : i32
    %268 = vector.broadcast %c51_i32 : i32 to vector<8x128xi32>
    %269 = arith.cmpi eq, %11, %268 : vector<8x128xi32>
    %c51 = arith.constant 51 : index
    %270 = memref.load %arg2[%c51] : memref<104xf32, #tpu.memory_space<smem>>
    %271 = vector.broadcast %270 : f32 to vector<8x128xf32>
    %272 = arith.select %269, %271, %232 : vector<8x128xi1>, vector<8x128xf32>
    %c52_i32 = arith.constant 52 : i32
    %273 = vector.broadcast %c52_i32 : i32 to vector<8x128xi32>
    %274 = arith.cmpi eq, %11, %273 : vector<8x128xi32>
    %c52 = arith.constant 52 : index
    %275 = memref.load %arg2[%c52] : memref<104xf32, #tpu.memory_space<smem>>
    %276 = vector.broadcast %275 : f32 to vector<8x128xf32>
    %277 = arith.select %274, %276, %237 : vector<8x128xi1>, vector<8x128xf32>
    %c53_i32 = arith.constant 53 : i32
    %278 = vector.broadcast %c53_i32 : i32 to vector<8x128xi32>
    %279 = arith.cmpi eq, %11, %278 : vector<8x128xi32>
    %c53 = arith.constant 53 : index
    %280 = memref.load %arg2[%c53] : memref<104xf32, #tpu.memory_space<smem>>
    %281 = vector.broadcast %280 : f32 to vector<8x128xf32>
    %282 = arith.select %279, %281, %242 : vector<8x128xi1>, vector<8x128xf32>
    %c54_i32 = arith.constant 54 : i32
    %283 = vector.broadcast %c54_i32 : i32 to vector<8x128xi32>
    %284 = arith.cmpi eq, %11, %283 : vector<8x128xi32>
    %c54 = arith.constant 54 : index
    %285 = memref.load %arg2[%c54] : memref<104xf32, #tpu.memory_space<smem>>
    %286 = vector.broadcast %285 : f32 to vector<8x128xf32>
    %287 = arith.select %284, %286, %247 : vector<8x128xi1>, vector<8x128xf32>
    %c55_i32 = arith.constant 55 : i32
    %288 = vector.broadcast %c55_i32 : i32 to vector<8x128xi32>
    %289 = arith.cmpi eq, %11, %288 : vector<8x128xi32>
    %c55 = arith.constant 55 : index
    %290 = memref.load %arg2[%c55] : memref<104xf32, #tpu.memory_space<smem>>
    %291 = vector.broadcast %290 : f32 to vector<8x128xf32>
    %292 = arith.select %289, %291, %252 : vector<8x128xi1>, vector<8x128xf32>
    %c56_i32 = arith.constant 56 : i32
    %293 = vector.broadcast %c56_i32 : i32 to vector<8x128xi32>
    %294 = arith.cmpi eq, %11, %293 : vector<8x128xi32>
    %c56 = arith.constant 56 : index
    %295 = memref.load %arg2[%c56] : memref<104xf32, #tpu.memory_space<smem>>
    %296 = vector.broadcast %295 : f32 to vector<8x128xf32>
    %297 = arith.select %294, %296, %257 : vector<8x128xi1>, vector<8x128xf32>
    %c57_i32 = arith.constant 57 : i32
    %298 = vector.broadcast %c57_i32 : i32 to vector<8x128xi32>
    %299 = arith.cmpi eq, %11, %298 : vector<8x128xi32>
    %c57 = arith.constant 57 : index
    %300 = memref.load %arg2[%c57] : memref<104xf32, #tpu.memory_space<smem>>
    %301 = vector.broadcast %300 : f32 to vector<8x128xf32>
    %302 = arith.select %299, %301, %262 : vector<8x128xi1>, vector<8x128xf32>
    %c58_i32 = arith.constant 58 : i32
    %303 = vector.broadcast %c58_i32 : i32 to vector<8x128xi32>
    %304 = arith.cmpi eq, %11, %303 : vector<8x128xi32>
    %c58 = arith.constant 58 : index
    %305 = memref.load %arg2[%c58] : memref<104xf32, #tpu.memory_space<smem>>
    %306 = vector.broadcast %305 : f32 to vector<8x128xf32>
    %307 = arith.select %304, %306, %267 : vector<8x128xi1>, vector<8x128xf32>
    %c59_i32 = arith.constant 59 : i32
    %308 = vector.broadcast %c59_i32 : i32 to vector<8x128xi32>
    %309 = arith.cmpi eq, %11, %308 : vector<8x128xi32>
    %c59 = arith.constant 59 : index
    %310 = memref.load %arg2[%c59] : memref<104xf32, #tpu.memory_space<smem>>
    %311 = vector.broadcast %310 : f32 to vector<8x128xf32>
    %312 = arith.select %309, %311, %272 : vector<8x128xi1>, vector<8x128xf32>
    %c60_i32 = arith.constant 60 : i32
    %313 = vector.broadcast %c60_i32 : i32 to vector<8x128xi32>
    %314 = arith.cmpi eq, %11, %313 : vector<8x128xi32>
    %c60 = arith.constant 60 : index
    %315 = memref.load %arg2[%c60] : memref<104xf32, #tpu.memory_space<smem>>
    %316 = vector.broadcast %315 : f32 to vector<8x128xf32>
    %317 = arith.select %314, %316, %277 : vector<8x128xi1>, vector<8x128xf32>
    %c61_i32 = arith.constant 61 : i32
    %318 = vector.broadcast %c61_i32 : i32 to vector<8x128xi32>
    %319 = arith.cmpi eq, %11, %318 : vector<8x128xi32>
    %c61 = arith.constant 61 : index
    %320 = memref.load %arg2[%c61] : memref<104xf32, #tpu.memory_space<smem>>
    %321 = vector.broadcast %320 : f32 to vector<8x128xf32>
    %322 = arith.select %319, %321, %282 : vector<8x128xi1>, vector<8x128xf32>
    %c62_i32 = arith.constant 62 : i32
    %323 = vector.broadcast %c62_i32 : i32 to vector<8x128xi32>
    %324 = arith.cmpi eq, %11, %323 : vector<8x128xi32>
    %c62 = arith.constant 62 : index
    %325 = memref.load %arg2[%c62] : memref<104xf32, #tpu.memory_space<smem>>
    %326 = vector.broadcast %325 : f32 to vector<8x128xf32>
    %327 = arith.select %324, %326, %287 : vector<8x128xi1>, vector<8x128xf32>
    %c63_i32 = arith.constant 63 : i32
    %328 = vector.broadcast %c63_i32 : i32 to vector<8x128xi32>
    %329 = arith.cmpi eq, %11, %328 : vector<8x128xi32>
    %c63 = arith.constant 63 : index
    %330 = memref.load %arg2[%c63] : memref<104xf32, #tpu.memory_space<smem>>
    %331 = vector.broadcast %330 : f32 to vector<8x128xf32>
    %332 = arith.select %329, %331, %292 : vector<8x128xi1>, vector<8x128xf32>
    %c64_i32 = arith.constant 64 : i32
    %333 = vector.broadcast %c64_i32 : i32 to vector<8x128xi32>
    %334 = arith.cmpi eq, %11, %333 : vector<8x128xi32>
    %c64 = arith.constant 64 : index
    %335 = memref.load %arg2[%c64] : memref<104xf32, #tpu.memory_space<smem>>
    %336 = vector.broadcast %335 : f32 to vector<8x128xf32>
    %337 = arith.select %334, %336, %297 : vector<8x128xi1>, vector<8x128xf32>
    %c65_i32 = arith.constant 65 : i32
    %338 = vector.broadcast %c65_i32 : i32 to vector<8x128xi32>
    %339 = arith.cmpi eq, %11, %338 : vector<8x128xi32>
    %c65 = arith.constant 65 : index
    %340 = memref.load %arg2[%c65] : memref<104xf32, #tpu.memory_space<smem>>
    %341 = vector.broadcast %340 : f32 to vector<8x128xf32>
    %342 = arith.select %339, %341, %302 : vector<8x128xi1>, vector<8x128xf32>
    %c66_i32 = arith.constant 66 : i32
    %343 = vector.broadcast %c66_i32 : i32 to vector<8x128xi32>
    %344 = arith.cmpi eq, %11, %343 : vector<8x128xi32>
    %c66 = arith.constant 66 : index
    %345 = memref.load %arg2[%c66] : memref<104xf32, #tpu.memory_space<smem>>
    %346 = vector.broadcast %345 : f32 to vector<8x128xf32>
    %347 = arith.select %344, %346, %307 : vector<8x128xi1>, vector<8x128xf32>
    %c67_i32 = arith.constant 67 : i32
    %348 = vector.broadcast %c67_i32 : i32 to vector<8x128xi32>
    %349 = arith.cmpi eq, %11, %348 : vector<8x128xi32>
    %c67 = arith.constant 67 : index
    %350 = memref.load %arg2[%c67] : memref<104xf32, #tpu.memory_space<smem>>
    %351 = vector.broadcast %350 : f32 to vector<8x128xf32>
    %352 = arith.select %349, %351, %312 : vector<8x128xi1>, vector<8x128xf32>
    %c68_i32 = arith.constant 68 : i32
    %353 = vector.broadcast %c68_i32 : i32 to vector<8x128xi32>
    %354 = arith.cmpi eq, %11, %353 : vector<8x128xi32>
    %c68 = arith.constant 68 : index
    %355 = memref.load %arg2[%c68] : memref<104xf32, #tpu.memory_space<smem>>
    %356 = vector.broadcast %355 : f32 to vector<8x128xf32>
    %357 = arith.select %354, %356, %317 : vector<8x128xi1>, vector<8x128xf32>
    %c69_i32 = arith.constant 69 : i32
    %358 = vector.broadcast %c69_i32 : i32 to vector<8x128xi32>
    %359 = arith.cmpi eq, %11, %358 : vector<8x128xi32>
    %c69 = arith.constant 69 : index
    %360 = memref.load %arg2[%c69] : memref<104xf32, #tpu.memory_space<smem>>
    %361 = vector.broadcast %360 : f32 to vector<8x128xf32>
    %362 = arith.select %359, %361, %322 : vector<8x128xi1>, vector<8x128xf32>
    %c70_i32 = arith.constant 70 : i32
    %363 = vector.broadcast %c70_i32 : i32 to vector<8x128xi32>
    %364 = arith.cmpi eq, %11, %363 : vector<8x128xi32>
    %c70 = arith.constant 70 : index
    %365 = memref.load %arg2[%c70] : memref<104xf32, #tpu.memory_space<smem>>
    %366 = vector.broadcast %365 : f32 to vector<8x128xf32>
    %367 = arith.select %364, %366, %327 : vector<8x128xi1>, vector<8x128xf32>
    %c71_i32 = arith.constant 71 : i32
    %368 = vector.broadcast %c71_i32 : i32 to vector<8x128xi32>
    %369 = arith.cmpi eq, %11, %368 : vector<8x128xi32>
    %c71 = arith.constant 71 : index
    %370 = memref.load %arg2[%c71] : memref<104xf32, #tpu.memory_space<smem>>
    %371 = vector.broadcast %370 : f32 to vector<8x128xf32>
    %372 = arith.select %369, %371, %332 : vector<8x128xi1>, vector<8x128xf32>
    %c72_i32 = arith.constant 72 : i32
    %373 = vector.broadcast %c72_i32 : i32 to vector<8x128xi32>
    %374 = arith.cmpi eq, %11, %373 : vector<8x128xi32>
    %c72 = arith.constant 72 : index
    %375 = memref.load %arg2[%c72] : memref<104xf32, #tpu.memory_space<smem>>
    %376 = vector.broadcast %375 : f32 to vector<8x128xf32>
    %377 = arith.select %374, %376, %337 : vector<8x128xi1>, vector<8x128xf32>
    %c73_i32 = arith.constant 73 : i32
    %378 = vector.broadcast %c73_i32 : i32 to vector<8x128xi32>
    %379 = arith.cmpi eq, %11, %378 : vector<8x128xi32>
    %c73 = arith.constant 73 : index
    %380 = memref.load %arg2[%c73] : memref<104xf32, #tpu.memory_space<smem>>
    %381 = vector.broadcast %380 : f32 to vector<8x128xf32>
    %382 = arith.select %379, %381, %342 : vector<8x128xi1>, vector<8x128xf32>
    %c74_i32 = arith.constant 74 : i32
    %383 = vector.broadcast %c74_i32 : i32 to vector<8x128xi32>
    %384 = arith.cmpi eq, %11, %383 : vector<8x128xi32>
    %c74 = arith.constant 74 : index
    %385 = memref.load %arg2[%c74] : memref<104xf32, #tpu.memory_space<smem>>
    %386 = vector.broadcast %385 : f32 to vector<8x128xf32>
    %387 = arith.select %384, %386, %347 : vector<8x128xi1>, vector<8x128xf32>
    %c75_i32 = arith.constant 75 : i32
    %388 = vector.broadcast %c75_i32 : i32 to vector<8x128xi32>
    %389 = arith.cmpi eq, %11, %388 : vector<8x128xi32>
    %c75 = arith.constant 75 : index
    %390 = memref.load %arg2[%c75] : memref<104xf32, #tpu.memory_space<smem>>
    %391 = vector.broadcast %390 : f32 to vector<8x128xf32>
    %392 = arith.select %389, %391, %352 : vector<8x128xi1>, vector<8x128xf32>
    %c76_i32 = arith.constant 76 : i32
    %393 = vector.broadcast %c76_i32 : i32 to vector<8x128xi32>
    %394 = arith.cmpi eq, %11, %393 : vector<8x128xi32>
    %c76 = arith.constant 76 : index
    %395 = memref.load %arg2[%c76] : memref<104xf32, #tpu.memory_space<smem>>
    %396 = vector.broadcast %395 : f32 to vector<8x128xf32>
    %397 = arith.select %394, %396, %357 : vector<8x128xi1>, vector<8x128xf32>
    %c77_i32 = arith.constant 77 : i32
    %398 = vector.broadcast %c77_i32 : i32 to vector<8x128xi32>
    %399 = arith.cmpi eq, %11, %398 : vector<8x128xi32>
    %c77 = arith.constant 77 : index
    %400 = memref.load %arg2[%c77] : memref<104xf32, #tpu.memory_space<smem>>
    %401 = vector.broadcast %400 : f32 to vector<8x128xf32>
    %402 = arith.select %399, %401, %362 : vector<8x128xi1>, vector<8x128xf32>
    %c78_i32 = arith.constant 78 : i32
    %403 = vector.broadcast %c78_i32 : i32 to vector<8x128xi32>
    %404 = arith.cmpi eq, %11, %403 : vector<8x128xi32>
    %c78 = arith.constant 78 : index
    %405 = memref.load %arg2[%c78] : memref<104xf32, #tpu.memory_space<smem>>
    %406 = vector.broadcast %405 : f32 to vector<8x128xf32>
    %407 = arith.select %404, %406, %367 : vector<8x128xi1>, vector<8x128xf32>
    %c79_i32 = arith.constant 79 : i32
    %408 = vector.broadcast %c79_i32 : i32 to vector<8x128xi32>
    %409 = arith.cmpi eq, %11, %408 : vector<8x128xi32>
    %c79 = arith.constant 79 : index
    %410 = memref.load %arg2[%c79] : memref<104xf32, #tpu.memory_space<smem>>
    %411 = vector.broadcast %410 : f32 to vector<8x128xf32>
    %412 = arith.select %409, %411, %372 : vector<8x128xi1>, vector<8x128xf32>
    %c80_i32 = arith.constant 80 : i32
    %413 = vector.broadcast %c80_i32 : i32 to vector<8x128xi32>
    %414 = arith.cmpi eq, %11, %413 : vector<8x128xi32>
    %c80 = arith.constant 80 : index
    %415 = memref.load %arg2[%c80] : memref<104xf32, #tpu.memory_space<smem>>
    %416 = vector.broadcast %415 : f32 to vector<8x128xf32>
    %417 = arith.select %414, %416, %377 : vector<8x128xi1>, vector<8x128xf32>
    %c81_i32 = arith.constant 81 : i32
    %418 = vector.broadcast %c81_i32 : i32 to vector<8x128xi32>
    %419 = arith.cmpi eq, %11, %418 : vector<8x128xi32>
    %c81 = arith.constant 81 : index
    %420 = memref.load %arg2[%c81] : memref<104xf32, #tpu.memory_space<smem>>
    %421 = vector.broadcast %420 : f32 to vector<8x128xf32>
    %422 = arith.select %419, %421, %382 : vector<8x128xi1>, vector<8x128xf32>
    %c82_i32 = arith.constant 82 : i32
    %423 = vector.broadcast %c82_i32 : i32 to vector<8x128xi32>
    %424 = arith.cmpi eq, %11, %423 : vector<8x128xi32>
    %c82 = arith.constant 82 : index
    %425 = memref.load %arg2[%c82] : memref<104xf32, #tpu.memory_space<smem>>
    %426 = vector.broadcast %425 : f32 to vector<8x128xf32>
    %427 = arith.select %424, %426, %387 : vector<8x128xi1>, vector<8x128xf32>
    %c83_i32 = arith.constant 83 : i32
    %428 = vector.broadcast %c83_i32 : i32 to vector<8x128xi32>
    %429 = arith.cmpi eq, %11, %428 : vector<8x128xi32>
    %c83 = arith.constant 83 : index
    %430 = memref.load %arg2[%c83] : memref<104xf32, #tpu.memory_space<smem>>
    %431 = vector.broadcast %430 : f32 to vector<8x128xf32>
    %432 = arith.select %429, %431, %392 : vector<8x128xi1>, vector<8x128xf32>
    %c84_i32 = arith.constant 84 : i32
    %433 = vector.broadcast %c84_i32 : i32 to vector<8x128xi32>
    %434 = arith.cmpi eq, %11, %433 : vector<8x128xi32>
    %c84 = arith.constant 84 : index
    %435 = memref.load %arg2[%c84] : memref<104xf32, #tpu.memory_space<smem>>
    %436 = vector.broadcast %435 : f32 to vector<8x128xf32>
    %437 = arith.select %434, %436, %397 : vector<8x128xi1>, vector<8x128xf32>
    %c85_i32 = arith.constant 85 : i32
    %438 = vector.broadcast %c85_i32 : i32 to vector<8x128xi32>
    %439 = arith.cmpi eq, %11, %438 : vector<8x128xi32>
    %c85 = arith.constant 85 : index
    %440 = memref.load %arg2[%c85] : memref<104xf32, #tpu.memory_space<smem>>
    %441 = vector.broadcast %440 : f32 to vector<8x128xf32>
    %442 = arith.select %439, %441, %402 : vector<8x128xi1>, vector<8x128xf32>
    %c86_i32 = arith.constant 86 : i32
    %443 = vector.broadcast %c86_i32 : i32 to vector<8x128xi32>
    %444 = arith.cmpi eq, %11, %443 : vector<8x128xi32>
    %c86 = arith.constant 86 : index
    %445 = memref.load %arg2[%c86] : memref<104xf32, #tpu.memory_space<smem>>
    %446 = vector.broadcast %445 : f32 to vector<8x128xf32>
    %447 = arith.select %444, %446, %407 : vector<8x128xi1>, vector<8x128xf32>
    %c87_i32 = arith.constant 87 : i32
    %448 = vector.broadcast %c87_i32 : i32 to vector<8x128xi32>
    %449 = arith.cmpi eq, %11, %448 : vector<8x128xi32>
    %c87 = arith.constant 87 : index
    %450 = memref.load %arg2[%c87] : memref<104xf32, #tpu.memory_space<smem>>
    %451 = vector.broadcast %450 : f32 to vector<8x128xf32>
    %452 = arith.select %449, %451, %412 : vector<8x128xi1>, vector<8x128xf32>
    %c88_i32 = arith.constant 88 : i32
    %453 = vector.broadcast %c88_i32 : i32 to vector<8x128xi32>
    %454 = arith.cmpi eq, %11, %453 : vector<8x128xi32>
    %c88 = arith.constant 88 : index
    %455 = memref.load %arg2[%c88] : memref<104xf32, #tpu.memory_space<smem>>
    %456 = vector.broadcast %455 : f32 to vector<8x128xf32>
    %457 = arith.select %454, %456, %417 : vector<8x128xi1>, vector<8x128xf32>
    %c89_i32 = arith.constant 89 : i32
    %458 = vector.broadcast %c89_i32 : i32 to vector<8x128xi32>
    %459 = arith.cmpi eq, %11, %458 : vector<8x128xi32>
    %c89 = arith.constant 89 : index
    %460 = memref.load %arg2[%c89] : memref<104xf32, #tpu.memory_space<smem>>
    %461 = vector.broadcast %460 : f32 to vector<8x128xf32>
    %462 = arith.select %459, %461, %422 : vector<8x128xi1>, vector<8x128xf32>
    %c90_i32 = arith.constant 90 : i32
    %463 = vector.broadcast %c90_i32 : i32 to vector<8x128xi32>
    %464 = arith.cmpi eq, %11, %463 : vector<8x128xi32>
    %c90 = arith.constant 90 : index
    %465 = memref.load %arg2[%c90] : memref<104xf32, #tpu.memory_space<smem>>
    %466 = vector.broadcast %465 : f32 to vector<8x128xf32>
    %467 = arith.select %464, %466, %427 : vector<8x128xi1>, vector<8x128xf32>
    %c91_i32 = arith.constant 91 : i32
    %468 = vector.broadcast %c91_i32 : i32 to vector<8x128xi32>
    %469 = arith.cmpi eq, %11, %468 : vector<8x128xi32>
    %c91 = arith.constant 91 : index
    %470 = memref.load %arg2[%c91] : memref<104xf32, #tpu.memory_space<smem>>
    %471 = vector.broadcast %470 : f32 to vector<8x128xf32>
    %472 = arith.select %469, %471, %432 : vector<8x128xi1>, vector<8x128xf32>
    %c92_i32 = arith.constant 92 : i32
    %473 = vector.broadcast %c92_i32 : i32 to vector<8x128xi32>
    %474 = arith.cmpi eq, %11, %473 : vector<8x128xi32>
    %c92 = arith.constant 92 : index
    %475 = memref.load %arg2[%c92] : memref<104xf32, #tpu.memory_space<smem>>
    %476 = vector.broadcast %475 : f32 to vector<8x128xf32>
    %477 = arith.select %474, %476, %437 : vector<8x128xi1>, vector<8x128xf32>
    %c93_i32 = arith.constant 93 : i32
    %478 = vector.broadcast %c93_i32 : i32 to vector<8x128xi32>
    %479 = arith.cmpi eq, %11, %478 : vector<8x128xi32>
    %c93 = arith.constant 93 : index
    %480 = memref.load %arg2[%c93] : memref<104xf32, #tpu.memory_space<smem>>
    %481 = vector.broadcast %480 : f32 to vector<8x128xf32>
    %482 = arith.select %479, %481, %442 : vector<8x128xi1>, vector<8x128xf32>
    %c94_i32 = arith.constant 94 : i32
    %483 = vector.broadcast %c94_i32 : i32 to vector<8x128xi32>
    %484 = arith.cmpi eq, %11, %483 : vector<8x128xi32>
    %c94 = arith.constant 94 : index
    %485 = memref.load %arg2[%c94] : memref<104xf32, #tpu.memory_space<smem>>
    %486 = vector.broadcast %485 : f32 to vector<8x128xf32>
    %487 = arith.select %484, %486, %447 : vector<8x128xi1>, vector<8x128xf32>
    %c95_i32 = arith.constant 95 : i32
    %488 = vector.broadcast %c95_i32 : i32 to vector<8x128xi32>
    %489 = arith.cmpi eq, %11, %488 : vector<8x128xi32>
    %c95 = arith.constant 95 : index
    %490 = memref.load %arg2[%c95] : memref<104xf32, #tpu.memory_space<smem>>
    %491 = vector.broadcast %490 : f32 to vector<8x128xf32>
    %492 = arith.select %489, %491, %452 : vector<8x128xi1>, vector<8x128xf32>
    %c96_i32 = arith.constant 96 : i32
    %493 = vector.broadcast %c96_i32 : i32 to vector<8x128xi32>
    %494 = arith.cmpi eq, %11, %493 : vector<8x128xi32>
    %c96 = arith.constant 96 : index
    %495 = memref.load %arg2[%c96] : memref<104xf32, #tpu.memory_space<smem>>
    %496 = vector.broadcast %495 : f32 to vector<8x128xf32>
    %497 = arith.select %494, %496, %457 : vector<8x128xi1>, vector<8x128xf32>
    %c97_i32 = arith.constant 97 : i32
    %498 = vector.broadcast %c97_i32 : i32 to vector<8x128xi32>
    %499 = arith.cmpi eq, %11, %498 : vector<8x128xi32>
    %c97 = arith.constant 97 : index
    %500 = memref.load %arg2[%c97] : memref<104xf32, #tpu.memory_space<smem>>
    %501 = vector.broadcast %500 : f32 to vector<8x128xf32>
    %502 = arith.select %499, %501, %462 : vector<8x128xi1>, vector<8x128xf32>
    %c98_i32 = arith.constant 98 : i32
    %503 = vector.broadcast %c98_i32 : i32 to vector<8x128xi32>
    %504 = arith.cmpi eq, %11, %503 : vector<8x128xi32>
    %c98 = arith.constant 98 : index
    %505 = memref.load %arg2[%c98] : memref<104xf32, #tpu.memory_space<smem>>
    %506 = vector.broadcast %505 : f32 to vector<8x128xf32>
    %507 = arith.select %504, %506, %467 : vector<8x128xi1>, vector<8x128xf32>
    %c99_i32 = arith.constant 99 : i32
    %508 = vector.broadcast %c99_i32 : i32 to vector<8x128xi32>
    %509 = arith.cmpi eq, %11, %508 : vector<8x128xi32>
    %c99 = arith.constant 99 : index
    %510 = memref.load %arg2[%c99] : memref<104xf32, #tpu.memory_space<smem>>
    %511 = vector.broadcast %510 : f32 to vector<8x128xf32>
    %512 = arith.select %509, %511, %472 : vector<8x128xi1>, vector<8x128xf32>
    %c100_i32_5 = arith.constant 100 : i32
    %513 = vector.broadcast %c100_i32_5 : i32 to vector<8x128xi32>
    %514 = arith.cmpi eq, %11, %513 : vector<8x128xi32>
    %c100 = arith.constant 100 : index
    %515 = memref.load %arg2[%c100] : memref<104xf32, #tpu.memory_space<smem>>
    %516 = vector.broadcast %515 : f32 to vector<8x128xf32>
    %517 = arith.select %514, %516, %477 : vector<8x128xi1>, vector<8x128xf32>
    %c101_i32 = arith.constant 101 : i32
    %518 = vector.broadcast %c101_i32 : i32 to vector<8x128xi32>
    %519 = arith.cmpi eq, %11, %518 : vector<8x128xi32>
    %c101 = arith.constant 101 : index
    %520 = memref.load %arg2[%c101] : memref<104xf32, #tpu.memory_space<smem>>
    %521 = vector.broadcast %520 : f32 to vector<8x128xf32>
    %522 = arith.select %519, %521, %482 : vector<8x128xi1>, vector<8x128xf32>
    %c102_i32 = arith.constant 102 : i32
    %523 = vector.broadcast %c102_i32 : i32 to vector<8x128xi32>
    %524 = arith.cmpi eq, %11, %523 : vector<8x128xi32>
    %c102 = arith.constant 102 : index
    %525 = memref.load %arg2[%c102] : memref<104xf32, #tpu.memory_space<smem>>
    %526 = vector.broadcast %525 : f32 to vector<8x128xf32>
    %527 = arith.select %524, %526, %487 : vector<8x128xi1>, vector<8x128xf32>
    %c103_i32 = arith.constant 103 : i32
    %528 = vector.broadcast %c103_i32 : i32 to vector<8x128xi32>
    %529 = arith.cmpi eq, %11, %528 : vector<8x128xi32>
    %c103 = arith.constant 103 : index
    %530 = memref.load %arg2[%c103] : memref<104xf32, #tpu.memory_space<smem>>
    %531 = vector.broadcast %530 : f32 to vector<8x128xf32>
    %532 = arith.select %529, %531, %492 : vector<8x128xi1>, vector<8x128xf32>
    %533 = arith.addf %497, %502 : vector<8x128xf32>
    %534 = arith.addf %507, %512 : vector<8x128xf32>
    %535 = arith.addf %517, %522 : vector<8x128xf32>
    %536 = arith.addf %527, %532 : vector<8x128xf32>
    %537 = arith.addf %533, %534 : vector<8x128xf32>
    %538 = arith.addf %535, %536 : vector<8x128xf32>
    %539 = arith.addf %537, %538 : vector<8x128xf32>
    %540 = arith.index_cast %1 : i32 to index
    %c0_6 = arith.constant 0 : index
    %541 = vector.load %arg3[%540, %c0_6] : memref<8x128xf32, #tpu.memory_space<vmem>>, vector<8x128xf32>
    tpu.vector_store %arg3[%540, %c0_6], %539 {strides = array<i32>} : memref<8x128xf32, #tpu.memory_space<vmem>>, vector<8x128xf32>,
    %c1_i32_7 = arith.constant 1 : i32
    return
  }
  func.func @transform_0(%arg0: i32) -> (i32, i32) {
    %c0_i32 = arith.constant 0 : i32
    %c0_i32_0 = arith.constant 0 : i32
    return %arg0, %c0_i32 : i32, i32
  }
  func.func @transform_1(%arg0: i32) -> i32 {
    %c0_i32 = arith.constant 0 : i32
    %c0_i32_0 = arith.constant 0 : i32
    return %c0_i32 : i32
  }
  func.func @transform_2(%arg0: i32) -> (i32, i32) {
    %c0_i32 = arith.constant 0 : i32
    %c0_i32_0 = arith.constant 0 : i32
    return %arg0, %c0_i32 : i32, i32
  }
}

</mosaic_0001>

<llo_original>
// kernel: tpu_custom_call.1
$region0: #{tpu_custom_call.1}
  #allocation0 [shape = 'u32[]', space=smem, size = 0x4, offset = 0x4, fixed_abs, tag = 'smem constant byte address 0x4 - core index']
  #allocation1 [shape = 'u32[144,128]{1,0:T(1,128)}', space=vmem, size = 0x12000, scoped, tag = 'internal scratch']
  %s0 = inlined_call_operand.hbm [shape: f32[8,128], index: 0, kind: input, shape index: {}]
  %s1 = inlined_call_operand.vmem [shape: f32[104], index: 1, kind: input, shape index: {}]
  %s2 = inlined_call_operand.hbm [shape: f32[8,128], index: 2, kind: output, shape index: {}]
  %s3 = sld [smem:[#allocation0]]
  $region26: #{tpu_custom_call.1} parent=0
    _
  %s5 = ssub.s32 1, %s3
  %s6 = scalar_select 0, %s5, %s3
  $region1: #{tpu_custom_call.1} parent=0
    #allocation2 [shape = 'u8[4096]{0}', space=vmem, size = 0x1000, scoped, tag = 'input window, operand 0, single buffered']
    #allocation3 [shape = 's32[1]{0}', space=sflag, size = 0x4, scoped, tag = 'scoped memory for tpu_custom_call.1']
    #allocation4 [shape = 's32[1]{0}', space=sflag, size = 0x4, scoped, tag = 'scoped memory for tpu_custom_call.1']
    #allocation5 [shape = 's32[1]{0}', space=sflag, size = 0x4, scoped, tag = 'scoped memory for tpu_custom_call.1']
    #allocation6 [shape = 'u8[512]{0}', space=smem, size = 0x200, scoped, tag = 'input window, operand 1, single buffered']
    #allocation7 [shape = 'u8[4096]{0}', space=vmem, size = 0x1000, scoped, tag = 'output window, operand 0, single buffered']
    %7 = vsyncpa [#allocation3], 0
    %8 = vsyncpa [#allocation5], 0
    %9 = vsyncpa [#allocation4], 0
    // Predicated region
    $region2: #{tpu_custom_call.1} parent=1 // pred_check
      _
    $region3: #{tpu_custom_call.1} parent=1 // pred_check_branch
      %11 = sbr.rel (0) target = $region5
    $region4: #{tpu_custom_call.1} parent=1 // pred_region
      %s13 = ssub.s32 128, 128
      %14 = vsyncadd [#allocation3], %s13
      %s16 = sshll.u32 [#allocation2], 4
      %s17 = int_to_ptr.vmem [resolvable:$true] %s16
      %19 = dma.hbm_to_vmem [thread:$0]  %s0, 128, %s17, [#allocation3]
    $region5: #{tpu_custom_call.1} parent=1 // pred_fallthru
      _
    // Predicated region
    $region6: #{tpu_custom_call.1} parent=1 // pred_check
      _
    $region7: #{tpu_custom_call.1} parent=1 // pred_check_branch
      %21 = sbr.rel (0) target = $region9
    $region8: #{tpu_custom_call.1} parent=1 // pred_region
      %s23 = ssub.s32 16, 16
      %24 = vsyncadd [#allocation5], %s23
      %s26 = sshll.u32 %s1, 4
      %s27 = int_to_ptr.vmem [resolvable:$true] %s26
      %29 = dma.vmem_to_smem %s27, 16, [#allocation6], [#allocation5]
    $region9: #{tpu_custom_call.1} parent=1 // pred_fallthru
      _
    // Predicated region
    $region10: #{tpu_custom_call.1} parent=1 // pred_check
      _
    $region11: #{tpu_custom_call.1} parent=1 // pred_check_branch
      %31 = sbr.rel (0) target = $region13
    $region12: #{tpu_custom_call.1} parent=1 // pred_region
      %32 = dma.done [#allocation3], 128
    $region13: #{tpu_custom_call.1} parent=1 // pred_fallthru
      _
    // Predicated region
    $region14: #{tpu_custom_call.1} parent=1 // pred_check
      _
    $region15: #{tpu_custom_call.1} parent=1 // pred_check_branch
      %34 = sbr.rel (0) target = $region17
    $region16: #{tpu_custom_call.1} parent=1 // pred_region
      %35 = dma.done [#allocation5], 16
    $region17: #{tpu_custom_call.1} parent=1 // pred_fallthru
      _
    %36 = sfence
    %v37 = vld [vmem:[#allocation2] sm:$0xff]
    %v38 = vmul.f32 %v37, 100.0
    %v39 = vcvt.f32.s32.ties.to.even %v38
    %vm40 = vcmp.gt.s32.totalorder %v39, 0
    %v41 = vsel %vm40, %v39, 0
    %vm42 = vcmp.lt.s32.totalorder %v41, 100
    %v43 = vsel %vm42, %v41, 100
    %vm44 = vcmp.eq.s32.totalorder %v43, 0
    %s45 = sld [smem:[#allocation6]]
    %v46 = vstv %s45
    %v47 = vsel %vm44, %v46, 0.0
    %vm48 = vcmp.eq.s32.totalorder %v43, 1
    %s49 = sld [smem:[#allocation6 + $0x1]]
    %v50 = vstv %s49
    %v51 = vsel %vm48, %v50, 0.0
    %vm52 = vcmp.eq.s32.totalorder %v43, 2
    %s53 = sld [smem:[#allocation6 + $0x2]]
    %v54 = vstv %s53
    %v55 = vsel %vm52, %v54, 0.0
    %vm56 = vcmp.eq.s32.totalorder %v43, 3
    %s57 = sld [smem:[#allocation6 + $0x3]]
    %v58 = vstv %s57
    %v59 = vsel %vm56, %v58, 0.0
    %vm60 = vcmp.eq.s32.totalorder %v43, 4
    %s61 = sld [smem:[#allocation6 + $0x4]]
    %v62 = vstv %s61
    %v63 = vsel %vm60, %v62, 0.0
    %vm64 = vcmp.eq.s32.totalorder %v43, 5
    %s65 = sld [smem:[#allocation6 + $0x5]]
    %v66 = vstv %s65
    %v67 = vsel %vm64, %v66, 0.0
    %vm68 = vcmp.eq.s32.totalorder %v43, 6
    %s69 = sld [smem:[#allocation6 + $0x6]]
    %v70 = vstv %s69
    %v71 = vsel %vm68, %v70, 0.0
    %vm72 = vcmp.eq.s32.totalorder %v43, 7
    %s73 = sld [smem:[#allocation6 + $0x7]]
    %v74 = vstv %s73
    %v75 = vsel %vm72, %v74, 0.0
    %vm76 = vcmp.eq.s32.totalorder %v43, 8
    %s77 = sld [smem:[#allocation6 + $0x8]]
    %v78 = vstv %s77
    %v79 = vsel %vm76, %v78, %v47
    %vm80 = vcmp.eq.s32.totalorder %v43, 9
    %s81 = sld [smem:[#allocation6 + $0x9]]
    %v82 = vstv %s81
    %v83 = vsel %vm80, %v82, %v51
    %vm84 = vcmp.eq.s32.totalorder %v43, 10
    %s85 = sld [smem:[#allocation6 + $0xa]]
    %v86 = vstv %s85
    %v87 = vsel %vm84, %v86, %v55
    %vm88 = vcmp.eq.s32.totalorder %v43, 11
    %s89 = sld [smem:[#allocation6 + $0xb]]
    %v90 = vstv %s89
    %v91 = vsel %vm88, %v90, %v59
    %vm92 = vcmp.eq.s32.totalorder %v43, 12
    %s93 = sld [smem:[#allocation6 + $0xc]]
    %v94 = vstv %s93
    %v95 = vsel %vm92, %v94, %v63
    %vm96 = vcmp.eq.s32.totalorder %v43, 13
    %s97 = sld [smem:[#allocation6 + $0xd]]
    %v98 = vstv %s97
    %v99 = vsel %vm96, %v98, %v67
    %vm100 = vcmp.eq.s32.totalorder %v43, 14
    %s101 = sld [smem:[#allocation6 + $0xe]]
    %v102 = vstv %s101
    %v103 = vsel %vm100, %v102, %v71
    %vm104 = vcmp.eq.s32.totalorder %v43, 15
    %s105 = sld [smem:[#allocation6 + $0xf]]
    %v106 = vstv %s105
    %v107 = vsel %vm104, %v106, %v75
    %vm108 = vcmp.eq.s32.totalorder %v43, 16
    %s109 = sld [smem:[#allocation6 + $0x10]]
    %v110 = vstv %s109
    %v111 = vsel %vm108, %v110, %v79
    %vm112 = vcmp.eq.s32.totalorder %v43, 17
    %s113 = sld [smem:[#allocation6 + $0x11]]
    %v114 = vstv %s113
    %v115 = vsel %vm112, %v114, %v83
    %vm116 = vcmp.eq.s32.totalorder %v43, 18
    %s117 = sld [smem:[#allocation6 + $0x12]]
    %v118 = vstv %s117
    %v119 = vsel %vm116, %v118, %v87
    %vm120 = vcmp.eq.s32.totalorder %v43, 19
    %s121 = sld [smem:[#allocation6 + $0x13]]
    %v122 = vstv %s121
    %v123 = vsel %vm120, %v122, %v91
    %vm124 = vcmp.eq.s32.totalorder %v43, 20
    %s125 = sld [smem:[#allocation6 + $0x14]]
    %v126 = vstv %s125
    %v127 = vsel %vm124, %v126, %v95
    %vm128 = vcmp.eq.s32.totalorder %v43, 21
    %s129 = sld [smem:[#allocation6 + $0x15]]
    %v130 = vstv %s129
    %v131 = vsel %vm128, %v130, %v99
    %vm132 = vcmp.eq.s32.totalorder %v43, 22
    %s133 = sld [smem:[#allocation6 + $0x16]]
    %v134 = vstv %s133
    %v135 = vsel %vm132, %v134, %v103
    %vm136 = vcmp.eq.s32.totalorder %v43, 23
    %s137 = sld [smem:[#allocation6 + $0x17]]
    %v138 = vstv %s137
    %v139 = vsel %vm136, %v138, %v107
    %vm140 = vcmp.eq.s32.totalorder %v43, 24
    %s141 = sld [smem:[#allocation6 + $0x18]]
    %v142 = vstv %s141
    %v143 = vsel %vm140, %v142, %v111
    %vm144 = vcmp.eq.s32.totalorder %v43, 25
    %s145 = sld [smem:[#allocation6 + $0x19]]
    %v146 = vstv %s145
    %v147 = vsel %vm144, %v146, %v115
    %vm148 = vcmp.eq.s32.totalorder %v43, 26
    %s149 = sld [smem:[#allocation6 + $0x1a]]
    %v150 = vstv %s149
    %v151 = vsel %vm148, %v150, %v119
    %vm152 = vcmp.eq.s32.totalorder %v43, 27
    %s153 = sld [smem:[#allocation6 + $0x1b]]
    %v154 = vstv %s153
    %v155 = vsel %vm152, %v154, %v123
    %vm156 = vcmp.eq.s32.totalorder %v43, 28
    %s157 = sld [smem:[#allocation6 + $0x1c]]
    %v158 = vstv %s157
    %v159 = vsel %vm156, %v158, %v127
    %vm160 = vcmp.eq.s32.totalorder %v43, 29
    %s161 = sld [smem:[#allocation6 + $0x1d]]
    %v162 = vstv %s161
    %v163 = vsel %vm160, %v162, %v131
    %vm164 = vcmp.eq.s32.totalorder %v43, 30
    %s165 = sld [smem:[#allocation6 + $0x1e]]
    %v166 = vstv %s165
    %v167 = vsel %vm164, %v166, %v135
    %vm168 = vcmp.eq.s32.totalorder %v43, 31
    %s169 = sld [smem:[#allocation6 + $0x1f]]
    %v170 = vstv %s169
    %v171 = vsel %vm168, %v170, %v139
    %vm172 = vcmp.eq.s32.totalorder %v43, 32
    %s173 = sld [smem:[#allocation6 + $0x20]]
    %v174 = vstv %s173
    %v175 = vsel %vm172, %v174, %v143
    %vm176 = vcmp.eq.s32.totalorder %v43, 33
    %s177 = sld [smem:[#allocation6 + $0x21]]
    %v178 = vstv %s177
    %v179 = vsel %vm176, %v178, %v147
    %vm180 = vcmp.eq.s32.totalorder %v43, 34
    %s181 = sld [smem:[#allocation6 + $0x22]]
    %v182 = vstv %s181
    %v183 = vsel %vm180, %v182, %v151
    %vm184 = vcmp.eq.s32.totalorder %v43, 35
    %s185 = sld [smem:[#allocation6 + $0x23]]
    %v186 = vstv %s185
    %v187 = vsel %vm184, %v186, %v155
    %vm188 = vcmp.eq.s32.totalorder %v43, 36
    %s189 = sld [smem:[#allocation6 + $0x24]]
    %v190 = vstv %s189
    %v191 = vsel %vm188, %v190, %v159
    %vm192 = vcmp.eq.s32.totalorder %v43, 37
    %s193 = sld [smem:[#allocation6 + $0x25]]
    %v194 = vstv %s193
    %v195 = vsel %vm192, %v194, %v163
    %vm196 = vcmp.eq.s32.totalorder %v43, 38
    %s197 = sld [smem:[#allocation6 + $0x26]]
    %v198 = vstv %s197
    %v199 = vsel %vm196, %v198, %v167
    %vm200 = vcmp.eq.s32.totalorder %v43, 39
    %s201 = sld [smem:[#allocation6 + $0x27]]
    %v202 = vstv %s201
    %v203 = vsel %vm200, %v202, %v171
    %vm204 = vcmp.eq.s32.totalorder %v43, 40
    %s205 = sld [smem:[#allocation6 + $0x28]]
    %v206 = vstv %s205
    %v207 = vsel %vm204, %v206, %v175
    %vm208 = vcmp.eq.s32.totalorder %v43, 41
    %s209 = sld [smem:[#allocation6 + $0x29]]
    %v210 = vstv %s209
    %v211 = vsel %vm208, %v210, %v179
    %vm212 = vcmp.eq.s32.totalorder %v43, 42
    %s213 = sld [smem:[#allocation6 + $0x2a]]
    %v214 = vstv %s213
    %v215 = vsel %vm212, %v214, %v183
    %vm216 = vcmp.eq.s32.totalorder %v43, 43
    %s217 = sld [smem:[#allocation6 + $0x2b]]
    %v218 = vstv %s217
    %v219 = vsel %vm216, %v218, %v187
    %vm220 = vcmp.eq.s32.totalorder %v43, 44
    %s221 = sld [smem:[#allocation6 + $0x2c]]
    %v222 = vstv %s221
    %v223 = vsel %vm220, %v222, %v191
    %vm224 = vcmp.eq.s32.totalorder %v43, 45
    %s225 = sld [smem:[#allocation6 + $0x2d]]
    %v226 = vstv %s225
    %v227 = vsel %vm224, %v226, %v195
    %vm228 = vcmp.eq.s32.totalorder %v43, 46
    %s229 = sld [smem:[#allocation6 + $0x2e]]
    %v230 = vstv %s229
    %v231 = vsel %vm228, %v230, %v199
    %vm232 = vcmp.eq.s32.totalorder %v43, 47
    %s233 = sld [smem:[#allocation6 + $0x2f]]
    %v234 = vstv %s233
    %v235 = vsel %vm232, %v234, %v203
    %vm236 = vcmp.eq.s32.totalorder %v43, 48
    %s237 = sld [smem:[#allocation6 + $0x30]]
    %v238 = vstv %s237
    %v239 = vsel %vm236, %v238, %v207
    %vm240 = vcmp.eq.s32.totalorder %v43, 49
    %s241 = sld [smem:[#allocation6 + $0x31]]
    %v242 = vstv %s241
    %v243 = vsel %vm240, %v242, %v211
    %vm244 = vcmp.eq.s32.totalorder %v43, 50
    %s245 = sld [smem:[#allocation6 + $0x32]]
    %v246 = vstv %s245
    %v247 = vsel %vm244, %v246, %v215
    %vm248 = vcmp.eq.s32.totalorder %v43, 51
    %s249 = sld [smem:[#allocation6 + $0x33]]
    %v250 = vstv %s249
    %v251 = vsel %vm248, %v250, %v219
    %vm252 = vcmp.eq.s32.totalorder %v43, 52
    %s253 = sld [smem:[#allocation6 + $0x34]]
    %v254 = vstv %s253
    %v255 = vsel %vm252, %v254, %v223
    %vm256 = vcmp.eq.s32.totalorder %v43, 53
    %s257 = sld [smem:[#allocation6 + $0x35]]
    %v258 = vstv %s257
    %v259 = vsel %vm256, %v258, %v227
    %vm260 = vcmp.eq.s32.totalorder %v43, 54
    %s261 = sld [smem:[#allocation6 + $0x36]]
    %v262 = vstv %s261
    %v263 = vsel %vm260, %v262, %v231
    %vm264 = vcmp.eq.s32.totalorder %v43, 55
    %s265 = sld [smem:[#allocation6 + $0x37]]
    %v266 = vstv %s265
    %v267 = vsel %vm264, %v266, %v235
    %vm268 = vcmp.eq.s32.totalorder %v43, 56
    %s269 = sld [smem:[#allocation6 + $0x38]]
    %v270 = vstv %s269
    %v271 = vsel %vm268, %v270, %v239
    %vm272 = vcmp.eq.s32.totalorder %v43, 57
    %s273 = sld [smem:[#allocation6 + $0x39]]
    %v274 = vstv %s273
    %v275 = vsel %vm272, %v274, %v243
    %vm276 = vcmp.eq.s32.totalorder %v43, 58
    %s277 = sld [smem:[#allocation6 + $0x3a]]
    %v278 = vstv %s277
    %v279 = vsel %vm276, %v278, %v247
    %vm280 = vcmp.eq.s32.totalorder %v43, 59
    %s281 = sld [smem:[#allocation6 + $0x3b]]
    %v282 = vstv %s281
    %v283 = vsel %vm280, %v282, %v251
    %vm284 = vcmp.eq.s32.totalorder %v43, 60
    %s285 = sld [smem:[#allocation6 + $0x3c]]
    %v286 = vstv %s285
    %v287 = vsel %vm284, %v286, %v255
    %vm288 = vcmp.eq.s32.totalorder %v43, 61
    %s289 = sld [smem:[#allocation6 + $0x3d]]
    %v290 = vstv %s289
    %v291 = vsel %vm288, %v290, %v259
    %vm292 = vcmp.eq.s32.totalorder %v43, 62
    %s293 = sld [smem:[#allocation6 + $0x3e]]
    %v294 = vstv %s293
    %v295 = vsel %vm292, %v294, %v263
    %vm296 = vcmp.eq.s32.totalorder %v43, 63
    %s297 = sld [smem:[#allocation6 + $0x3f]]
    %v298 = vstv %s297
    %v299 = vsel %vm296, %v298, %v267
    %vm300 = vcmp.eq.s32.totalorder %v43, 64
    %s301 = sld [smem:[#allocation6 + $0x40]]
    %v302 = vstv %s301
    %v303 = vsel %vm300, %v302, %v271
    %vm304 = vcmp.eq.s32.totalorder %v43, 65
    %s305 = sld [smem:[#allocation6 + $0x41]]
    %v306 = vstv %s305
    %v307 = vsel %vm304, %v306, %v275
    %vm308 = vcmp.eq.s32.totalorder %v43, 66
    %s309 = sld [smem:[#allocation6 + $0x42]]
    %v310 = vstv %s309
    %v311 = vsel %vm308, %v310, %v279
    %vm312 = vcmp.eq.s32.totalorder %v43, 67
    %s313 = sld [smem:[#allocation6 + $0x43]]
    %v314 = vstv %s313
    %v315 = vsel %vm312, %v314, %v283
    %vm316 = vcmp.eq.s32.totalorder %v43, 68
    %s317 = sld [smem:[#allocation6 + $0x44]]
    %v318 = vstv %s317
    %v319 = vsel %vm316, %v318, %v287
    %vm320 = vcmp.eq.s32.totalorder %v43, 69
    %s321 = sld [smem:[#allocation6 + $0x45]]
    %v322 = vstv %s321
    %v323 = vsel %vm320, %v322, %v291
    %vm324 = vcmp.eq.s32.totalorder %v43, 70
    %s325 = sld [smem:[#allocation6 + $0x46]]
    %v326 = vstv %s325
    %v327 = vsel %vm324, %v326, %v295
    %vm328 = vcmp.eq.s32.totalorder %v43, 71
    %s329 = sld [smem:[#allocation6 + $0x47]]
    %v330 = vstv %s329
    %v331 = vsel %vm328, %v330, %v299
    %vm332 = vcmp.eq.s32.totalorder %v43, 72
    %s333 = sld [smem:[#allocation6 + $0x48]]
    %v334 = vstv %s333
    %v335 = vsel %vm332, %v334, %v303
    %vm336 = vcmp.eq.s32.totalorder %v43, 73
    %s337 = sld [smem:[#allocation6 + $0x49]]
    %v338 = vstv %s337
    %v339 = vsel %vm336, %v338, %v307
    %vm340 = vcmp.eq.s32.totalorder %v43, 74
    %s341 = sld [smem:[#allocation6 + $0x4a]]
    %v342 = vstv %s341
    %v343 = vsel %vm340, %v342, %v311
    %vm344 = vcmp.eq.s32.totalorder %v43, 75
    %s345 = sld [smem:[#allocation6 + $0x4b]]
    %v346 = vstv %s345
    %v347 = vsel %vm344, %v346, %v315
    %vm348 = vcmp.eq.s32.totalorder %v43, 76
    %s349 = sld [smem:[#allocation6 + $0x4c]]
    %v350 = vstv %s349
    %v351 = vsel %vm348, %v350, %v319
    %vm352 = vcmp.eq.s32.totalorder %v43, 77
    %s353 = sld [smem:[#allocation6 + $0x4d]]
    %v354 = vstv %s353
    %v355 = vsel %vm352, %v354, %v323
    %vm356 = vcmp.eq.s32.totalorder %v43, 78
    %s357 = sld [smem:[#allocation6 + $0x4e]]
    %v358 = vstv %s357
    %v359 = vsel %vm356, %v358, %v327
    %vm360 = vcmp.eq.s32.totalorder %v43, 79
    %s361 = sld [smem:[#allocation6 + $0x4f]]
    %v362 = vstv %s361
    %v363 = vsel %vm360, %v362, %v331
    %vm364 = vcmp.eq.s32.totalorder %v43, 80
    %s365 = sld [smem:[#allocation6 + $0x50]]
    %v366 = vstv %s365
    %v367 = vsel %vm364, %v366, %v335
    %vm368 = vcmp.eq.s32.totalorder %v43, 81
    %s369 = sld [smem:[#allocation6 + $0x51]]
    %v370 = vstv %s369
    %v371 = vsel %vm368, %v370, %v339
    %vm372 = vcmp.eq.s32.totalorder %v43, 82
    %s373 = sld [smem:[#allocation6 + $0x52]]
    %v374 = vstv %s373
    %v375 = vsel %vm372, %v374, %v343
    %vm376 = vcmp.eq.s32.totalorder %v43, 83
    %s377 = sld [smem:[#allocation6 + $0x53]]
    %v378 = vstv %s377
    %v379 = vsel %vm376, %v378, %v347
    %vm380 = vcmp.eq.s32.totalorder %v43, 84
    %s381 = sld [smem:[#allocation6 + $0x54]]
    %v382 = vstv %s381
    %v383 = vsel %vm380, %v382, %v351
    %vm384 = vcmp.eq.s32.totalorder %v43, 85
    %s385 = sld [smem:[#allocation6 + $0x55]]
    %v386 = vstv %s385
    %v387 = vsel %vm384, %v386, %v355
    %vm388 = vcmp.eq.s32.totalorder %v43, 86
    %s389 = sld [smem:[#allocation6 + $0x56]]
    %v390 = vstv %s389
    %v391 = vsel %vm388, %v390, %v359
    %vm392 = vcmp.eq.s32.totalorder %v43, 87
    %s393 = sld [smem:[#allocation6 + $0x57]]
    %v394 = vstv %s393
    %v395 = vsel %vm392, %v394, %v363
    %vm396 = vcmp.eq.s32.totalorder %v43, 88
    %s397 = sld [smem:[#allocation6 + $0x58]]
    %v398 = vstv %s397
    %v399 = vsel %vm396, %v398, %v367
    %vm400 = vcmp.eq.s32.totalorder %v43, 89
    %s401 = sld [smem:[#allocation6 + $0x59]]
    %v402 = vstv %s401
    %v403 = vsel %vm400, %v402, %v371
    %vm404 = vcmp.eq.s32.totalorder %v43, 90
    %s405 = sld [smem:[#allocation6 + $0x5a]]
    %v406 = vstv %s405
    %v407 = vsel %vm404, %v406, %v375
    %vm408 = vcmp.eq.s32.totalorder %v43, 91
    %s409 = sld [smem:[#allocation6 + $0x5b]]
    %v410 = vstv %s409
    %v411 = vsel %vm408, %v410, %v379
    %vm412 = vcmp.eq.s32.totalorder %v43, 92
    %s413 = sld [smem:[#allocation6 + $0x5c]]
    %v414 = vstv %s413
    %v415 = vsel %vm412, %v414, %v383
    %vm416 = vcmp.eq.s32.totalorder %v43, 93
    %s417 = sld [smem:[#allocation6 + $0x5d]]
    %v418 = vstv %s417
    %v419 = vsel %vm416, %v418, %v387
    %vm420 = vcmp.eq.s32.totalorder %v43, 94
    %s421 = sld [smem:[#allocation6 + $0x5e]]
    %v422 = vstv %s421
    %v423 = vsel %vm420, %v422, %v391
    %vm424 = vcmp.eq.s32.totalorder %v43, 95
    %s425 = sld [smem:[#allocation6 + $0x5f]]
    %v426 = vstv %s425
    %v427 = vsel %vm424, %v426, %v395
    %vm428 = vcmp.eq.s32.totalorder %v43, 96
    %s429 = sld [smem:[#allocation6 + $0x60]]
    %v430 = vstv %s429
    %v431 = vsel %vm428, %v430, %v399
    %vm432 = vcmp.eq.s32.totalorder %v43, 97
    %s433 = sld [smem:[#allocation6 + $0x61]]
    %v434 = vstv %s433
    %v435 = vsel %vm432, %v434, %v403
    %vm436 = vcmp.eq.s32.totalorder %v43, 98
    %s437 = sld [smem:[#allocation6 + $0x62]]
    %v438 = vstv %s437
    %v439 = vsel %vm436, %v438, %v407
    %vm440 = vcmp.eq.s32.totalorder %v43, 99
    %s441 = sld [smem:[#allocation6 + $0x63]]
    %v442 = vstv %s441
    %v443 = vsel %vm440, %v442, %v411
    %vm444 = vcmp.eq.s32.totalorder %v43, 100
    %s445 = sld [smem:[#allocation6 + $0x64]]
    %v446 = vstv %s445
    %v447 = vsel %vm444, %v446, %v415
    %vm448 = vcmp.eq.s32.totalorder %v43, 101
    %s449 = sld [smem:[#allocation6 + $0x65]]
    %v450 = vstv %s449
    %v451 = vsel %vm448, %v450, %v419
    %vm452 = vcmp.eq.s32.totalorder %v43, 102
    %s453 = sld [smem:[#allocation6 + $0x66]]
    %v454 = vstv %s453
    %v455 = vsel %vm452, %v454, %v423
    %vm456 = vcmp.eq.s32.totalorder %v43, 103
    %s457 = sld [smem:[#allocation6 + $0x67]]
    %v458 = vstv %s457
    %v459 = vsel %vm456, %v458, %v427
    %v460 = vadd.f32 %v431, %v435
    %v461 = vadd.f32 %v439, %v443
    %v462 = vadd.f32 %v447, %v451
    %v463 = vadd.f32 %v455, %v459
    %v464 = vadd.f32 %v460, %v461
    %v465 = vadd.f32 %v462, %v463
    %v466 = vadd.f32 %v464, %v465
    %467 = vst [vmem:[#allocation7] sm:$0xff] %v466
    // Predicated region
    $region18: #{tpu_custom_call.1} parent=1 // pred_check
      _
    $region19: #{tpu_custom_call.1} parent=1 // pred_check_branch
      %469 = sbr.rel (0) target = $region21
    $region20: #{tpu_custom_call.1} parent=1 // pred_region
      %s471 = ssub.s32 128, 128
      %472 = vsyncadd [#allocation4], %s471
      %s474 = sshll.u32 [#allocation7], 4
      %s475 = int_to_ptr.vmem [resolvable:$true] %s474
      %477 = dma.vmem_to_hbm [thread:$0]  %s475, 128, %s2, [#allocation4]
    $region21: #{tpu_custom_call.1} parent=1 // pred_fallthru
      _
    // Predicated region
    $region22: #{tpu_custom_call.1} parent=1 // pred_check
      _
    $region23: #{tpu_custom_call.1} parent=1 // pred_check_branch
      %479 = sbr.rel (0) target = $region25
    $region24: #{tpu_custom_call.1} parent=1 // pred_region
      %480 = dma.done [#allocation4], 128
    $region25: #{tpu_custom_call.1} parent=1 // pred_fallthru
      _
    %481 = vsyncpa [#allocation3], 1
    %482 = vsyncpa [#allocation4], 1
    %483 = vsyncpa [#allocation5], 1

</llo_original>
